<compile_context>
chip_gen: v5e
topology: v5e:2x2
jax: 0.10.0
libtpu: 0.0.40
codegen_flags: <defaults>
</compile_context>

<pallas_src>
import jax
import jax.numpy as jnp
from jax.experimental import pallas as pl
from jax.experimental.pallas import tpu as pltpu


def _build_impatient_receiver_kernel(T, B):
    """Kernel closure over the static time/batch sizes."""

    def kernel(emb_ref, w_ih_ref, w_hh_ref, b_h_ref, w_out_ref, b_out_ref,
               seq_ref, logprob_ref, ent_ref, hs_ref):
        H = w_hh_ref.shape[1]

        # ---- Hoisted input projection: one big MXU matmul over all T*B rows.
        # x_proj[t*B + b] = emb[t, b] @ W_ih + (b_ih + b_hh)
        x_proj = (jnp.dot(emb_ref[...], w_ih_ref[...],
                          preferred_element_type=jnp.float32)
                  + b_h_ref[...])                                  # (T*B, H)

        w_hh = w_hh_ref[...]                                       # resident (H, H)

        # ---- Serial recurrence, fully unrolled (T static & small) so the LLO
        # scheduler sees the whole chain; only h @ W_hh remains on the
        # critical path.  h_t = tanh(x_proj_t + h_{t-1} @ W_hh)
        h = jnp.zeros((B, H), jnp.float32)
        for t in range(T):
            r0 = t * B                                             # static offset
            h = jnp.tanh(x_proj[r0:r0 + B, :]
                         + jnp.dot(h, w_hh,
                                   preferred_element_type=jnp.float32))
            hs_ref[pl.ds(r0, B), :] = h                            # stash for the head

        # ---- Batched output head: one (T*B, H) @ (H, F) matmul + one
        # vectorized log-softmax / entropy / log-prob pass over all rows.
        out = (jnp.dot(hs_ref[...], w_out_ref[...],
                       preferred_element_type=jnp.float32)
               + b_out_ref[...])                                   # (T*B, F)
        m = jnp.max(out, axis=-1, keepdims=True)
        shifted = out - m
        e = jnp.exp(shifted)                    # single EUP exp pass, reused below
        s = jnp.sum(e, axis=-1, keepdims=True)
        log_s = jnp.log(s)
        logp = shifted - log_s                                     # log_softmax(out)
        p = e * pl.reciprocal(s)                                   # softmax, reuses e

        seq_ref[...] = logp
        ent_ref[...] = -jnp.sum(p * logp, axis=-1, keepdims=True)
        # eval mode: x = argmax(logp).  shifted has an exact 0 at the argmax,
        # so log_prob(x) = max(logp) = -log_s (no extra reduction needed).
        logprob_ref[...] = -log_s

    return kernel


def rnn_receiver_impatient_forward(message, params):
    """message: (B, T) int32 tokens. Returns (sequence, logits, entropy)."""
    embed_tbl = params["embedding"]   # (V, E)
    w_ih = params["w_ih"]             # (E, H)   (torch weight_ih_l0 transposed)
    w_hh = params["w_hh"]             # (H, H)   (torch weight_hh_l0 transposed)
    b_h = params["b_h"]               # (1, H)   (b_ih + b_hh)
    w_out = params["w_out"]           # (H, F)   (torch Linear weight transposed)
    b_out = params["b_out"]           # (1, F)

    B, T = message.shape
    E = embed_tbl.shape[1]
    H = w_hh.shape[0]
    F = w_out.shape[1]

    # Glue (table gather has no clean Pallas equivalent): embedding lookup,
    # gathered directly in time-major flat order (T*B, E) so no separate
    # activation transpose is materialized before the kernel.
    flat_idx = message.T.reshape(-1)                               # (T*B,) time-major
    emb_flat = jnp.take(embed_tbl, flat_idx, axis=0).astype(jnp.float32)  # (T*B, E)

    out_shapes = (
        jax.ShapeDtypeStruct((T * B, F), jnp.float32),   # per-step log-softmax
        jax.ShapeDtypeStruct((T * B, 1), jnp.float32),   # log_prob of argmax
        jax.ShapeDtypeStruct((T * B, 1), jnp.float32),   # entropy
    )

    seq_flat, lp_flat, ent_flat = pl.pallas_call(
        _build_impatient_receiver_kernel(T, B),
        out_shape=out_shapes,
        # No grid: everything (a few tens of KB) is VMEM-resident for a single
        # invocation, removing the per-grid-step pipeline overhead.
        scratch_shapes=[pltpu.VMEM((T * B, H), jnp.float32)],      # all hidden states
    )(emb_flat, w_ih, w_hh, b_h, w_out, b_out)

    # Back to PyTorch conventions (tiny reshape/transpose ops, fused by XLA).
    sequence = jnp.transpose(seq_flat.reshape(T, B, F), (1, 0, 2))  # (B, T, F)
    logits = lp_flat.reshape(T, B).T                                # (B, T)
    entropy = ent_flat.reshape(T, B).T                              # (B, T)
    return sequence, logits, entropy


def _reference_forward(message, params):
    """Pure-JAX reference of the same forward pass (sanity check)."""
    emb = jnp.take(params["embedding"], message, axis=0)            # (B, T, E)
    emb_tm = jnp.transpose(emb, (1, 0, 2)).astype(jnp.float32)      # (T, B, E)
    B = message.shape[0]
    H = params["w_hh"].shape[0]

    def step(h, x):
        h = jnp.tanh(x @ params["w_ih"] + h @ params["w_hh"] + params["b_h"][0])
        return h, h

    h0 = jnp.zeros((B, H), jnp.float32)
    _, hs = jax.lax.scan(step, h0, emb_tm)                          # (T, B, H)
    out = hs @ params["w_out"] + params["b_out"][0]                 # (T, B, F)
    logp = jax.nn.log_softmax(out, axis=-1)
    p = jnp.exp(logp)
    ent = -jnp.sum(p * logp, axis=-1)
    lp = jnp.max(logp, axis=-1)
    return (jnp.transpose(logp, (1, 0, 2)),
            jnp.transpose(lp, (1, 0)),
            jnp.transpose(ent, (1, 0)))


def make_params(key, vocab_size, embed_dim, hidden_size, n_features):
    ks = jax.random.split(key, 7)
    scale = 0.1
    return {
        "embedding": scale * jax.random.normal(ks[0], (vocab_size, embed_dim), jnp.float32),
        "w_ih": scale * jax.random.normal(ks[1], (embed_dim, hidden_size), jnp.float32),
        "w_hh": scale * jax.random.normal(ks[2], (hidden_size, hidden_size), jnp.float32),
        "b_h": (scale * jax.random.normal(ks[3], (1, hidden_size), jnp.float32)
                + scale * jax.random.normal(ks[4], (1, hidden_size), jnp.float32)),
        "w_out": scale * jax.random.normal(ks[5], (hidden_size, n_features), jnp.float32),
        "b_out": scale * jax.random.normal(ks[6], (1, n_features), jnp.float32),
    }


if __name__ == "__main__":
    # Small shapes consistent with the module's forward.
    batch, max_len = 8, 8
    vocab_size, embed_dim, hidden_size, n_features = 10, 16, 32, 16

    key = jax.random.PRNGKey(0)
    k_msg, k_par = jax.random.split(key)
    message = jax.random.randint(k_msg, (batch, max_len), 0, vocab_size, jnp.int32)
    params = make_params(k_par, vocab_size, embed_dim, hidden_size, n_features)

    sequence, logits, entropy = jax.block_until_ready(
        rnn_receiver_impatient_forward(message, params))

    # Sanity check against a pure-JAX reference.
    ref_seq, ref_lp, ref_ent = _reference_forward(message, params)
    assert sequence.shape == (batch, max_len, n_features)
    assert logits.shape == (batch, max_len)
    assert entropy.shape == (batch, max_len)
    assert jnp.allclose(sequence, ref_seq, atol=1e-3, rtol=1e-3)
    assert jnp.allclose(logits, ref_lp, atol=1e-3, rtol=1e-3)
    assert jnp.allclose(entropy, ref_ent, atol=1e-3, rtol=1e-3)

    print("KERNEL_OK")
</pallas_src>

<mosaic_0001>
module attributes {stable_mosaic.version = 11 : i64} {
  func.func @kernel(%arg0: memref<64x16xf32, #tpu.memory_space<vmem>>, %arg1: memref<16x32xf32, #tpu.memory_space<vmem>>, %arg2: memref<32x32xf32, #tpu.memory_space<vmem>>, %arg3: memref<1x32xf32, #tpu.memory_space<vmem>>, %arg4: memref<32x16xf32, #tpu.memory_space<vmem>>, %arg5: memref<1x16xf32, #tpu.memory_space<vmem>>, %arg6: memref<64x16xf32, #tpu.memory_space<vmem>>, %arg7: memref<64x1xf32, #tpu.memory_space<vmem>>, %arg8: memref<64x1xf32, #tpu.memory_space<vmem>>, %arg9: memref<64x32xf32, #tpu.memory_space<vmem>>) attributes {dimension_semantics = [], scalar_prefetch = 0 : i64, scratch_operands = 1 : i64, tpu.core_type = #tpu.core_type<tc>} {
    %c0 = arith.constant 0 : index
    %c0_0 = arith.constant 0 : index
    %0 = vector.load %arg0[%c0, %c0_0] : memref<64x16xf32, #tpu.memory_space<vmem>>, vector<64x16xf32>
    %c0_1 = arith.constant 0 : index
    %c0_2 = arith.constant 0 : index
    %1 = vector.load %arg1[%c0_1, %c0_2] : memref<16x32xf32, #tpu.memory_space<vmem>>, vector<16x32xf32>
    %cst = arith.constant dense<0.000000e+00> : vector<64x32xf32>
    %2 = tpu.matmul %0, %1, %cst {dimension_numbers = #tpu.dot_dimension_numbers<[1], [0], [0], [1], [0, 0, 1, 1], [], []>} : vector<64x16xf32>, vector<16x32xf32>, vector<64x32xf32> -> vector<64x32xf32>
    %c0_3 = arith.constant 0 : index
    %c0_4 = arith.constant 0 : index
    %3 = vector.load %arg3[%c0_3, %c0_4] : memref<1x32xf32, #tpu.memory_space<vmem>>, vector<1x32xf32>
    %4 = vector.broadcast %3 : vector<1x32xf32> to vector<64x32xf32>
    %5 = arith.addf %2, %4 : vector<64x32xf32>
    %c0_5 = arith.constant 0 : index
    %c0_6 = arith.constant 0 : index
    %6 = vector.load %arg2[%c0_5, %c0_6] : memref<32x32xf32, #tpu.memory_space<vmem>>, vector<32x32xf32>
    %cst_7 = arith.constant 0.000000e+00 : f32
    %7 = vector.broadcast %cst_7 : f32 to vector<8x32xf32>
    %8 = vector.extract_strided_slice %5 {offsets = [0, 0], sizes = [8, 32], strides = [1, 1]} : vector<64x32xf32> to vector<8x32xf32>
    %cst_8 = arith.constant dense<0.000000e+00> : vector<8x32xf32>
    %9 = tpu.matmul %7, %6, %cst_8 {dimension_numbers = #tpu.dot_dimension_numbers<[1], [0], [0], [1], [0, 0, 1, 1], [], []>} : vector<8x32xf32>, vector<32x32xf32>, vector<8x32xf32> -> vector<8x32xf32>
    %10 = arith.addf %8, %9 : vector<8x32xf32>
    %11 = math.tanh %10 : vector<8x32xf32>
    %c0_9 = arith.constant 0 : index
    %c0_10 = arith.constant 0 : index
    %12 = vector.load %arg9[%c0_9, %c0_10] : memref<64x32xf32, #tpu.memory_space<vmem>>, vector<8x32xf32>
    tpu.vector_store %arg9[%c0_9, %c0_10], %11 {strides = array<i32>} : memref<64x32xf32, #tpu.memory_space<vmem>>, vector<8x32xf32>,
    %13 = vector.extract_strided_slice %5 {offsets = [8, 0], sizes = [8, 32], strides = [1, 1]} : vector<64x32xf32> to vector<8x32xf32>
    %cst_11 = arith.constant dense<0.000000e+00> : vector<8x32xf32>
    %14 = tpu.matmul %11, %6, %cst_11 {dimension_numbers = #tpu.dot_dimension_numbers<[1], [0], [0], [1], [0, 0, 1, 1], [], []>} : vector<8x32xf32>, vector<32x32xf32>, vector<8x32xf32> -> vector<8x32xf32>
    %15 = arith.addf %13, %14 : vector<8x32xf32>
    %16 = math.tanh %15 : vector<8x32xf32>
    %c8 = arith.constant 8 : index
    %c0_12 = arith.constant 0 : index
    %17 = vector.load %arg9[%c8, %c0_12] : memref<64x32xf32, #tpu.memory_space<vmem>>, vector<8x32xf32>
    tpu.vector_store %arg9[%c8, %c0_12], %16 {strides = array<i32>} : memref<64x32xf32, #tpu.memory_space<vmem>>, vector<8x32xf32>,
    %18 = vector.extract_strided_slice %5 {offsets = [16, 0], sizes = [8, 32], strides = [1, 1]} : vector<64x32xf32> to vector<8x32xf32>
    %cst_13 = arith.constant dense<0.000000e+00> : vector<8x32xf32>
    %19 = tpu.matmul %16, %6, %cst_13 {dimension_numbers = #tpu.dot_dimension_numbers<[1], [0], [0], [1], [0, 0, 1, 1], [], []>} : vector<8x32xf32>, vector<32x32xf32>, vector<8x32xf32> -> vector<8x32xf32>
    %20 = arith.addf %18, %19 : vector<8x32xf32>
    %21 = math.tanh %20 : vector<8x32xf32>
    %c16 = arith.constant 16 : index
    %c0_14 = arith.constant 0 : index
    %22 = vector.load %arg9[%c16, %c0_14] : memref<64x32xf32, #tpu.memory_space<vmem>>, vector<8x32xf32>
    tpu.vector_store %arg9[%c16, %c0_14], %21 {strides = array<i32>} : memref<64x32xf32, #tpu.memory_space<vmem>>, vector<8x32xf32>,
    %23 = vector.extract_strided_slice %5 {offsets = [24, 0], sizes = [8, 32], strides = [1, 1]} : vector<64x32xf32> to vector<8x32xf32>
    %cst_15 = arith.constant dense<0.000000e+00> : vector<8x32xf32>
    %24 = tpu.matmul %21, %6, %cst_15 {dimension_numbers = #tpu.dot_dimension_numbers<[1], [0], [0], [1], [0, 0, 1, 1], [], []>} : vector<8x32xf32>, vector<32x32xf32>, vector<8x32xf32> -> vector<8x32xf32>
    %25 = arith.addf %23, %24 : vector<8x32xf32>
    %26 = math.tanh %25 : vector<8x32xf32>
    %c24 = arith.constant 24 : index
    %c0_16 = arith.constant 0 : index
    %27 = vector.load %arg9[%c24, %c0_16] : memref<64x32xf32, #tpu.memory_space<vmem>>, vector<8x32xf32>
    tpu.vector_store %arg9[%c24, %c0_16], %26 {strides = array<i32>} : memref<64x32xf32, #tpu.memory_space<vmem>>, vector<8x32xf32>,
    %28 = vector.extract_strided_slice %5 {offsets = [32, 0], sizes = [8, 32], strides = [1, 1]} : vector<64x32xf32> to vector<8x32xf32>
    %cst_17 = arith.constant dense<0.000000e+00> : vector<8x32xf32>
    %29 = tpu.matmul %26, %6, %cst_17 {dimension_numbers = #tpu.dot_dimension_numbers<[1], [0], [0], [1], [0, 0, 1, 1], [], []>} : vector<8x32xf32>, vector<32x32xf32>, vector<8x32xf32> -> vector<8x32xf32>
    %30 = arith.addf %28, %29 : vector<8x32xf32>
    %31 = math.tanh %30 : vector<8x32xf32>
    %c32 = arith.constant 32 : index
    %c0_18 = arith.constant 0 : index
    %32 = vector.load %arg9[%c32, %c0_18] : memref<64x32xf32, #tpu.memory_space<vmem>>, vector<8x32xf32>
    tpu.vector_store %arg9[%c32, %c0_18], %31 {strides = array<i32>} : memref<64x32xf32, #tpu.memory_space<vmem>>, vector<8x32xf32>,
    %33 = vector.extract_strided_slice %5 {offsets = [40, 0], sizes = [8, 32], strides = [1, 1]} : vector<64x32xf32> to vector<8x32xf32>
    %cst_19 = arith.constant dense<0.000000e+00> : vector<8x32xf32>
    %34 = tpu.matmul %31, %6, %cst_19 {dimension_numbers = #tpu.dot_dimension_numbers<[1], [0], [0], [1], [0, 0, 1, 1], [], []>} : vector<8x32xf32>, vector<32x32xf32>, vector<8x32xf32> -> vector<8x32xf32>
    %35 = arith.addf %33, %34 : vector<8x32xf32>
    %36 = math.tanh %35 : vector<8x32xf32>
    %c40 = arith.constant 40 : index
    %c0_20 = arith.constant 0 : index
    %37 = vector.load %arg9[%c40, %c0_20] : memref<64x32xf32, #tpu.memory_space<vmem>>, vector<8x32xf32>
    tpu.vector_store %arg9[%c40, %c0_20], %36 {strides = array<i32>} : memref<64x32xf32, #tpu.memory_space<vmem>>, vector<8x32xf32>,
    %38 = vector.extract_strided_slice %5 {offsets = [48, 0], sizes = [8, 32], strides = [1, 1]} : vector<64x32xf32> to vector<8x32xf32>
    %cst_21 = arith.constant dense<0.000000e+00> : vector<8x32xf32>
    %39 = tpu.matmul %36, %6, %cst_21 {dimension_numbers = #tpu.dot_dimension_numbers<[1], [0], [0], [1], [0, 0, 1, 1], [], []>} : vector<8x32xf32>, vector<32x32xf32>, vector<8x32xf32> -> vector<8x32xf32>
    %40 = arith.addf %38, %39 : vector<8x32xf32>
    %41 = math.tanh %40 : vector<8x32xf32>
    %c48 = arith.constant 48 : index
    %c0_22 = arith.constant 0 : index
    %42 = vector.load %arg9[%c48, %c0_22] : memref<64x32xf32, #tpu.memory_space<vmem>>, vector<8x32xf32>
    tpu.vector_store %arg9[%c48, %c0_22], %41 {strides = array<i32>} : memref<64x32xf32, #tpu.memory_space<vmem>>, vector<8x32xf32>,
    %43 = vector.extract_strided_slice %5 {offsets = [56, 0], sizes = [8, 32], strides = [1, 1]} : vector<64x32xf32> to vector<8x32xf32>
    %cst_23 = arith.constant dense<0.000000e+00> : vector<8x32xf32>
    %44 = tpu.matmul %41, %6, %cst_23 {dimension_numbers = #tpu.dot_dimension_numbers<[1], [0], [0], [1], [0, 0, 1, 1], [], []>} : vector<8x32xf32>, vector<32x32xf32>, vector<8x32xf32> -> vector<8x32xf32>
    %45 = arith.addf %43, %44 : vector<8x32xf32>
    %46 = math.tanh %45 : vector<8x32xf32>
    %c56 = arith.constant 56 : index
    %c0_24 = arith.constant 0 : index
    %47 = vector.load %arg9[%c56, %c0_24] : memref<64x32xf32, #tpu.memory_space<vmem>>, vector<8x32xf32>
    tpu.vector_store %arg9[%c56, %c0_24], %46 {strides = array<i32>} : memref<64x32xf32, #tpu.memory_space<vmem>>, vector<8x32xf32>,
    %c0_25 = arith.constant 0 : index
    %c0_26 = arith.constant 0 : index
    %48 = vector.load %arg9[%c0_25, %c0_26] : memref<64x32xf32, #tpu.memory_space<vmem>>, vector<64x32xf32>
    %c0_27 = arith.constant 0 : index
    %c0_28 = arith.constant 0 : index
    %49 = vector.load %arg4[%c0_27, %c0_28] : memref<32x16xf32, #tpu.memory_space<vmem>>, vector<32x16xf32>
    %cst_29 = arith.constant dense<0.000000e+00> : vector<64x16xf32>
    %50 = tpu.matmul %48, %49, %cst_29 {dimension_numbers = #tpu.dot_dimension_numbers<[1], [0], [0], [1], [0, 0, 1, 1], [], []>} : vector<64x32xf32>, vector<32x16xf32>, vector<64x16xf32> -> vector<64x16xf32>
    %c0_30 = arith.constant 0 : index
    %c0_31 = arith.constant 0 : index
    %51 = vector.load %arg5[%c0_30, %c0_31] : memref<1x16xf32, #tpu.memory_space<vmem>>, vector<1x16xf32>
    %52 = vector.broadcast %51 : vector<1x16xf32> to vector<64x16xf32>
    %53 = arith.addf %50, %52 : vector<64x16xf32>
    %cst_32 = arith.constant dense<0xFF800000> : vector<64xf32>
    %54 = vector.multi_reduction <maximumf>, %53, %cst_32 [1] : vector<64x16xf32> to vector<64xf32>
    %55 = vector.shape_cast %54 : vector<64xf32> to vector<64x1xf32>
    %56 = vector.broadcast %55 : vector<64x1xf32> to vector<64x16xf32>
    %57 = arith.subf %53, %56 : vector<64x16xf32>
    %58 = math.exp %57 : vector<64x16xf32>
    %cst_33 = arith.constant dense<0.000000e+00> : vector<64xf32>
    %59 = vector.multi_reduction <add>, %58, %cst_33 [1] : vector<64x16xf32> to vector<64xf32>
    %60 = vector.shape_cast %59 : vector<64xf32> to vector<64x1xf32>
    %61 = math.log %60 : vector<64x1xf32>
    %62 = vector.broadcast %61 : vector<64x1xf32> to vector<64x16xf32>
    %63 = arith.subf %57, %62 : vector<64x16xf32>
    %64 = tpu.reciprocal %60 : vector<64x1xf32> -> vector<64x1xf32>
    %65 = vector.broadcast %64 : vector<64x1xf32> to vector<64x16xf32>
    %66 = arith.mulf %58, %65 : vector<64x16xf32>
    %c0_34 = arith.constant 0 : index
    %c0_35 = arith.constant 0 : index
    %67 = vector.load %arg6[%c0_34, %c0_35] : memref<64x16xf32, #tpu.memory_space<vmem>>, vector<64x16xf32>
    tpu.vector_store %arg6[%c0_34, %c0_35], %63 {strides = array<i32>} : memref<64x16xf32, #tpu.memory_space<vmem>>, vector<64x16xf32>,
    %68 = arith.mulf %66, %63 : vector<64x16xf32>
    %cst_36 = arith.constant dense<0.000000e+00> : vector<64xf32>
    %69 = vector.multi_reduction <add>, %68, %cst_36 [1] : vector<64x16xf32> to vector<64xf32>
    %70 = vector.shape_cast %69 : vector<64xf32> to vector<64x1xf32>
    %cst_37 = arith.constant 0.000000e+00 : f32
    %71 = vector.broadcast %cst_37 : f32 to vector<64x1xf32>
    %72 = arith.subf %71, %70 : vector<64x1xf32>
    %c0_38 = arith.constant 0 : index
    %c0_39 = arith.constant 0 : index
    %73 = vector.load %arg8[%c0_38, %c0_39] : memref<64x1xf32, #tpu.memory_space<vmem>>, vector<64x1xf32>
    tpu.vector_store %arg8[%c0_38, %c0_39], %72 {strides = array<i32>} : memref<64x1xf32, #tpu.memory_space<vmem>>, vector<64x1xf32>,
    %cst_40 = arith.constant 0.000000e+00 : f32
    %74 = vector.broadcast %cst_40 : f32 to vector<64x1xf32>
    %75 = arith.subf %74, %61 : vector<64x1xf32>
    %c0_41 = arith.constant 0 : index
    %c0_42 = arith.constant 0 : index
    %76 = vector.load %arg7[%c0_41, %c0_42] : memref<64x1xf32, #tpu.memory_space<vmem>>, vector<64x1xf32>
    tpu.vector_store %arg7[%c0_41, %c0_42], %75 {strides = array<i32>} : memref<64x1xf32, #tpu.memory_space<vmem>>, vector<64x1xf32>,
    return
  }
}

</mosaic_0001>

<llo_original>
// kernel: tpu_custom_call.1
$region0: #{tpu_custom_call.1}
  #allocation0 [shape = 'u32[]', space=smem, size = 0x4, offset = 0x4, fixed_abs, tag = 'smem constant byte address 0x4 - core index']
  #allocation1 [shape = 'u32[72,128]{1,0:T(1,128)}', space=vmem, size = 0x9000, scoped, tag = 'internal scratch']
  #allocation2 [shape = 'f32[64,32]{1,0:T(8,128)}', space=vmem, size = 0x8000, scoped, tag = 'scratch operand']
  %s0 = inlined_call_operand.vmem [shape: f32[64,16], index: 0, kind: input, shape index: {}]
  %s1 = inlined_call_operand.vmem [shape: f32[16,32], index: 1, kind: input, shape index: {}]
  %s2 = inlined_call_operand.vmem [shape: f32[32,32], index: 2, kind: input, shape index: {}]
  %s3 = inlined_call_operand.vmem [shape: f32[1,32], index: 3, kind: input, shape index: {}]
  %s4 = inlined_call_operand.vmem [shape: f32[32,16], index: 4, kind: input, shape index: {}]
  %s5 = inlined_call_operand.vmem [shape: f32[1,16], index: 5, kind: input, shape index: {}]
  %s6 = inlined_call_operand.vmem [shape: f32[64,16], index: 6, kind: output, shape index: {0}]
  %s7 = inlined_call_operand.vmem [shape: f32[64,1], index: 7, kind: output, shape index: {1}]
  %s8 = inlined_call_operand.vmem [shape: f32[64,1], index: 8, kind: output, shape index: {2}]
  %9 = xla_tuple %s6, %s7, %s8
  %s10 = sld [smem:[#allocation0]]
  $region50: #{tpu_custom_call.1} parent=0
    _
  %s12 = ssub.s32 1, %s10
  %s13 = scalar_select 0, %s12, %s10
  // Predicated region
  $region2: #{tpu_custom_call.1} parent=0 // pred_check
    _
  $region3: #{tpu_custom_call.1} parent=0 // pred_check_branch
    %15 = sbr.rel (0) target = $region5
  $region4: #{tpu_custom_call.1} parent=0 // pred_region
    _
  $region5: #{tpu_custom_call.1} parent=0 // pred_fallthru
    _
  // Predicated region
  $region6: #{tpu_custom_call.1} parent=0 // pred_check
    _
  $region7: #{tpu_custom_call.1} parent=0 // pred_check_branch
    %17 = sbr.rel (0) target = $region9
  $region8: #{tpu_custom_call.1} parent=0 // pred_region
    _
  $region9: #{tpu_custom_call.1} parent=0 // pred_fallthru
    _
  // Predicated region
  $region10: #{tpu_custom_call.1} parent=0 // pred_check
    _
  $region11: #{tpu_custom_call.1} parent=0 // pred_check_branch
    %19 = sbr.rel (0) target = $region13
  $region12: #{tpu_custom_call.1} parent=0 // pred_region
    _
  $region13: #{tpu_custom_call.1} parent=0 // pred_fallthru
    _
  // Predicated region
  $region14: #{tpu_custom_call.1} parent=0 // pred_check
    _
  $region15: #{tpu_custom_call.1} parent=0 // pred_check_branch
    %21 = sbr.rel (0) target = $region17
  $region16: #{tpu_custom_call.1} parent=0 // pred_region
    _
  $region17: #{tpu_custom_call.1} parent=0 // pred_fallthru
    _
  // Predicated region
  $region18: #{tpu_custom_call.1} parent=0 // pred_check
    _
  $region19: #{tpu_custom_call.1} parent=0 // pred_check_branch
    %23 = sbr.rel (0) target = $region21
  $region20: #{tpu_custom_call.1} parent=0 // pred_region
    _
  $region21: #{tpu_custom_call.1} parent=0 // pred_fallthru
    _
  // Predicated region
  $region22: #{tpu_custom_call.1} parent=0 // pred_check
    _
  $region23: #{tpu_custom_call.1} parent=0 // pred_check_branch
    %25 = sbr.rel (0) target = $region25
  $region24: #{tpu_custom_call.1} parent=0 // pred_region
    _
  $region25: #{tpu_custom_call.1} parent=0 // pred_fallthru
    _
  %v26 = vld [vmem:[%s0] sm:$0xff]
  %v27 = vld [vmem:[%s0 + $0x8] sm:$0xff]
  %v28 = vld [vmem:[%s0 + $0x10] sm:$0xff]
  %v29 = vld [vmem:[%s0 + $0x18] sm:$0xff]
  %v30 = vld [vmem:[%s0 + $0x20] sm:$0xff]
  %v31 = vld [vmem:[%s0 + $0x28] sm:$0xff]
  %v32 = vld [vmem:[%s0 + $0x30] sm:$0xff]
  %v33 = vld [vmem:[%s0 + $0x38] sm:$0xff]
  %v34 = vld [vmem:[%s1] sm:$0xff]
  %v35 = vld [vmem:[%s1 + $0x8] sm:$0xff]
  %v36 = vld [vmem:[%s3] sm:$0x1]
  %v38 = vperm.slane %v36, 0
  %vm40 = vcmask 130048
  %v42 = vsel %vm40, %v26, 0
  %v45 = vsel %vm40, %v27, 0
  %v48 = vsel %vm40, %v28, 0
  %v51 = vsel %vm40, %v29, 0
  %v54 = vsel %vm40, %v30, 0
  %v57 = vsel %vm40, %v31, 0
  %v60 = vsel %vm40, %v32, 0
  %v63 = vsel %vm40, %v33, 0
  %65 = vmatpush.msra.mxu0 0.0
  %66 = vmatpush.msra.mxu0 0.0
  %67 = vmatpush.msra.mxu0 0.0
  %68 = vmatpush.msra.mxu0 0.0
  %69 = vmatpush.msra.mxu0 0.0
  %70 = vmatpush.msra.mxu0 0.0
  %71 = vmatpush.msra.mxu0 0.0
  %72 = vmatpush.msra.mxu0 0.0
  %73 = vmatpush.msra.mxu0 0.0
  %74 = vmatpush.msra.mxu0 0.0
  %75 = vmatpush.msra.mxu0 0.0
  %76 = vmatpush.msra.mxu0 0.0
  %77 = vmatpush.msra.mxu0 0.0
  %78 = vmatpush.msra.mxu0 0.0
  %79 = vmatpush.msra.mxu0 %v35
  %80 = vmatpush.msra.mxu0 %v34
  %81 = vmatmul.f32.gmra.mxu0 %v42
  %v82 = vpop.f32.mrf.mxu0
  %v83 = vadd.f32 %v38, %v82
  %84 = vmatmul.f32.gmra.mxu0 %v45
  %v85 = vpop.f32.mrf.mxu0
  %v86 = vadd.f32 %v38, %v85
  %87 = vmatmul.f32.gmra.mxu0 %v48
  %v88 = vpop.f32.mrf.mxu0
  %v89 = vadd.f32 %v38, %v88
  %90 = vmatmul.f32.gmra.mxu0 %v51
  %v91 = vpop.f32.mrf.mxu0
  %v92 = vadd.f32 %v38, %v91
  %93 = vmatmul.f32.gmra.mxu0 %v54
  %v94 = vpop.f32.mrf.mxu0
  %v95 = vadd.f32 %v38, %v94
  %96 = vmatmul.f32.gmra.mxu0 %v57
  %v97 = vpop.f32.mrf.mxu0
  %v98 = vadd.f32 %v38, %v97
  %99 = vmatmul.f32.gmra.mxu0 %v60
  %v100 = vpop.f32.mrf.mxu0
  %v101 = vadd.f32 %v38, %v100
  %102 = vmatmul.f32.gmra.mxu0 %v63
  %v103 = vpop.f32.mrf.mxu0
  %v104 = vadd.f32 %v38, %v103
  %105 = vdwg.mxu0
  %v106 = vld [vmem:[%s2] sm:$0xff]
  %v107 = vld [vmem:[%s2 + $0x8] sm:$0xff]
  %v108 = vld [vmem:[%s2 + $0x10] sm:$0xff]
  %v109 = vld [vmem:[%s2 + $0x18] sm:$0xff]
  %vm110 = vcmask 261120
  %v112 = vsel %vm110, 0.0, 0
  %114 = vmatpush.msra.mxu0 0.0
  %115 = vmatpush.msra.mxu0 0.0
  %116 = vmatpush.msra.mxu0 0.0
  %117 = vmatpush.msra.mxu0 0.0
  %118 = vmatpush.msra.mxu0 0.0
  %119 = vmatpush.msra.mxu0 0.0
  %120 = vmatpush.msra.mxu0 0.0
  %121 = vmatpush.msra.mxu0 0.0
  %122 = vmatpush.msra.mxu0 0.0
  %123 = vmatpush.msra.mxu0 0.0
  %124 = vmatpush.msra.mxu0 0.0
  %125 = vmatpush.msra.mxu0 0.0
  %126 = vmatpush.msra.mxu0 %v109
  %127 = vmatpush.msra.mxu0 %v108
  %128 = vmatpush.msra.mxu0 %v107
  %129 = vmatpush.msra.mxu0 %v106
  %130 = vmatmul.f32.gmra.mxu0 %v112
  %v131 = vpop.f32.mrf.mxu0
  %v132 = vadd.f32 0.0, %v131
  %133 = vdwg.mxu0
  %v134 = vadd.f32 %v83, %v132
  %v135 = vtanh.pop %v134
  %136 = vst.msk [vmem:[#allocation2] sm:$0xff] %vm110, %v135
  %v138 = vsel %vm110, %v135, 0
  %140 = vmatpush.msra.mxu0 0.0
  %141 = vmatpush.msra.mxu0 0.0
  %142 = vmatpush.msra.mxu0 0.0
  %143 = vmatpush.msra.mxu0 0.0
  %144 = vmatpush.msra.mxu0 0.0
  %145 = vmatpush.msra.mxu0 0.0
  %146 = vmatpush.msra.mxu0 0.0
  %147 = vmatpush.msra.mxu0 0.0
  %148 = vmatpush.msra.mxu0 0.0
  %149 = vmatpush.msra.mxu0 0.0
  %150 = vmatpush.msra.mxu0 0.0
  %151 = vmatpush.msra.mxu0 0.0
  %152 = vmatpush.msra.mxu0 %v109
  %153 = vmatpush.msra.mxu0 %v108
  %154 = vmatpush.msra.mxu0 %v107
  %155 = vmatpush.msra.mxu0 %v106
  %156 = vmatmul.f32.gmra.mxu0 %v138
  %v157 = vpop.f32.mrf.mxu0
  %v158 = vadd.f32 0.0, %v157
  %159 = vdwg.mxu0
  %v160 = vadd.f32 %v86, %v158
  %v161 = vtanh.pop %v160
  %162 = vst.msk [vmem:[#allocation2 + $0x8] sm:$0xff] %vm110, %v161
  %v164 = vsel %vm110, %v161, 0
  %166 = vmatpush.msra.mxu0 0.0
  %167 = vmatpush.msra.mxu0 0.0
  %168 = vmatpush.msra.mxu0 0.0
  %169 = vmatpush.msra.mxu0 0.0
  %170 = vmatpush.msra.mxu0 0.0
  %171 = vmatpush.msra.mxu0 0.0
  %172 = vmatpush.msra.mxu0 0.0
  %173 = vmatpush.msra.mxu0 0.0
  %174 = vmatpush.msra.mxu0 0.0
  %175 = vmatpush.msra.mxu0 0.0
  %176 = vmatpush.msra.mxu0 0.0
  %177 = vmatpush.msra.mxu0 0.0
  %178 = vmatpush.msra.mxu0 %v109
  %179 = vmatpush.msra.mxu0 %v108
  %180 = vmatpush.msra.mxu0 %v107
  %181 = vmatpush.msra.mxu0 %v106
  %182 = vmatmul.f32.gmra.mxu0 %v164
  %v183 = vpop.f32.mrf.mxu0
  %v184 = vadd.f32 0.0, %v183
  %185 = vdwg.mxu0
  %v186 = vadd.f32 %v89, %v184
  %v187 = vtanh.pop %v186
  %188 = vst.msk [vmem:[#allocation2 + $0x10] sm:$0xff] %vm110, %v187
  %v190 = vsel %vm110, %v187, 0
  %192 = vmatpush.msra.mxu0 0.0
  %193 = vmatpush.msra.mxu0 0.0
  %194 = vmatpush.msra.mxu0 0.0
  %195 = vmatpush.msra.mxu0 0.0
  %196 = vmatpush.msra.mxu0 0.0
  %197 = vmatpush.msra.mxu0 0.0
  %198 = vmatpush.msra.mxu0 0.0
  %199 = vmatpush.msra.mxu0 0.0
  %200 = vmatpush.msra.mxu0 0.0
  %201 = vmatpush.msra.mxu0 0.0
  %202 = vmatpush.msra.mxu0 0.0
  %203 = vmatpush.msra.mxu0 0.0
  %204 = vmatpush.msra.mxu0 %v109
  %205 = vmatpush.msra.mxu0 %v108
  %206 = vmatpush.msra.mxu0 %v107
  %207 = vmatpush.msra.mxu0 %v106
  %208 = vmatmul.f32.gmra.mxu0 %v190
  %v209 = vpop.f32.mrf.mxu0
  %v210 = vadd.f32 0.0, %v209
  %211 = vdwg.mxu0
  %v212 = vadd.f32 %v92, %v210
  %v213 = vtanh.pop %v212
  %214 = vst.msk [vmem:[#allocation2 + $0x18] sm:$0xff] %vm110, %v213
  %v216 = vsel %vm110, %v213, 0
  %218 = vmatpush.msra.mxu0 0.0
  %219 = vmatpush.msra.mxu0 0.0
  %220 = vmatpush.msra.mxu0 0.0
  %221 = vmatpush.msra.mxu0 0.0
  %222 = vmatpush.msra.mxu0 0.0
  %223 = vmatpush.msra.mxu0 0.0
  %224 = vmatpush.msra.mxu0 0.0
  %225 = vmatpush.msra.mxu0 0.0
  %226 = vmatpush.msra.mxu0 0.0
  %227 = vmatpush.msra.mxu0 0.0
  %228 = vmatpush.msra.mxu0 0.0
  %229 = vmatpush.msra.mxu0 0.0
  %230 = vmatpush.msra.mxu0 %v109
  %231 = vmatpush.msra.mxu0 %v108
  %232 = vmatpush.msra.mxu0 %v107
  %233 = vmatpush.msra.mxu0 %v106
  %234 = vmatmul.f32.gmra.mxu0 %v216
  %v235 = vpop.f32.mrf.mxu0
  %v236 = vadd.f32 0.0, %v235
  %237 = vdwg.mxu0
  %v238 = vadd.f32 %v95, %v236
  %v239 = vtanh.pop %v238
  %240 = vst.msk [vmem:[#allocation2 + $0x20] sm:$0xff] %vm110, %v239
  %v242 = vsel %vm110, %v239, 0
  %244 = vmatpush.msra.mxu0 0.0
  %245 = vmatpush.msra.mxu0 0.0
  %246 = vmatpush.msra.mxu0 0.0
  %247 = vmatpush.msra.mxu0 0.0
  %248 = vmatpush.msra.mxu0 0.0
  %249 = vmatpush.msra.mxu0 0.0
  %250 = vmatpush.msra.mxu0 0.0
  %251 = vmatpush.msra.mxu0 0.0
  %252 = vmatpush.msra.mxu0 0.0
  %253 = vmatpush.msra.mxu0 0.0
  %254 = vmatpush.msra.mxu0 0.0
  %255 = vmatpush.msra.mxu0 0.0
  %256 = vmatpush.msra.mxu0 %v109
  %257 = vmatpush.msra.mxu0 %v108
  %258 = vmatpush.msra.mxu0 %v107
  %259 = vmatpush.msra.mxu0 %v106
  %260 = vmatmul.f32.gmra.mxu0 %v242
  %v261 = vpop.f32.mrf.mxu0
  %v262 = vadd.f32 0.0, %v261
  %263 = vdwg.mxu0
  %v264 = vadd.f32 %v98, %v262
  %v265 = vtanh.pop %v264
  %266 = vst.msk [vmem:[#allocation2 + $0x28] sm:$0xff] %vm110, %v265
  %v268 = vsel %vm110, %v265, 0
  %270 = vmatpush.msra.mxu0 0.0
  %271 = vmatpush.msra.mxu0 0.0
  %272 = vmatpush.msra.mxu0 0.0
  %273 = vmatpush.msra.mxu0 0.0
  %274 = vmatpush.msra.mxu0 0.0
  %275 = vmatpush.msra.mxu0 0.0
  %276 = vmatpush.msra.mxu0 0.0
  %277 = vmatpush.msra.mxu0 0.0
  %278 = vmatpush.msra.mxu0 0.0
  %279 = vmatpush.msra.mxu0 0.0
  %280 = vmatpush.msra.mxu0 0.0
  %281 = vmatpush.msra.mxu0 0.0
  %282 = vmatpush.msra.mxu0 %v109
  %283 = vmatpush.msra.mxu0 %v108
  %284 = vmatpush.msra.mxu0 %v107
  %285 = vmatpush.msra.mxu0 %v106
  %286 = vmatmul.f32.gmra.mxu0 %v268
  %v287 = vpop.f32.mrf.mxu0
  %v288 = vadd.f32 0.0, %v287
  %289 = vdwg.mxu0
  %v290 = vadd.f32 %v101, %v288
  %v291 = vtanh.pop %v290
  %292 = vst.msk [vmem:[#allocation2 + $0x30] sm:$0xff] %vm110, %v291
  %v294 = vsel %vm110, %v291, 0
  %296 = vmatpush.msra.mxu0 0.0
  %297 = vmatpush.msra.mxu0 0.0
  %298 = vmatpush.msra.mxu0 0.0
  %299 = vmatpush.msra.mxu0 0.0
  %300 = vmatpush.msra.mxu0 0.0
  %301 = vmatpush.msra.mxu0 0.0
  %302 = vmatpush.msra.mxu0 0.0
  %303 = vmatpush.msra.mxu0 0.0
  %304 = vmatpush.msra.mxu0 0.0
  %305 = vmatpush.msra.mxu0 0.0
  %306 = vmatpush.msra.mxu0 0.0
  %307 = vmatpush.msra.mxu0 0.0
  %308 = vmatpush.msra.mxu0 %v109
  %309 = vmatpush.msra.mxu0 %v108
  %310 = vmatpush.msra.mxu0 %v107
  %311 = vmatpush.msra.mxu0 %v106
  %312 = vmatmul.f32.gmra.mxu0 %v294
  %v313 = vpop.f32.mrf.mxu0
  %v314 = vadd.f32 0.0, %v313
  %315 = vdwg.mxu0
  %v316 = vadd.f32 %v104, %v314
  %v317 = vtanh.pop %v316
  %318 = vst.msk [vmem:[#allocation2 + $0x38] sm:$0xff] %vm110, %v317
  %v319 = vld [vmem:[#allocation2] sm:$0xff]
  %v320 = vld [vmem:[#allocation2 + $0x8] sm:$0xff]
  %v321 = vld [vmem:[#allocation2 + $0x10] sm:$0xff]
  %v322 = vld [vmem:[#allocation2 + $0x18] sm:$0xff]
  %v323 = vld [vmem:[#allocation2 + $0x20] sm:$0xff]
  %v324 = vld [vmem:[#allocation2 + $0x28] sm:$0xff]
  %v325 = vld [vmem:[#allocation2 + $0x30] sm:$0xff]
  %v326 = vld [vmem:[#allocation2 + $0x38] sm:$0xff]
  %v327 = vld [vmem:[%s4] sm:$0xff]
  %v328 = vld [vmem:[%s4 + $0x8] sm:$0xff]
  %v329 = vld [vmem:[%s4 + $0x10] sm:$0xff]
  %v330 = vld [vmem:[%s4 + $0x18] sm:$0xff]
  %v331 = vld [vmem:[%s5] sm:$0x1]
  %v333 = vperm.slane %v331, 0
  %v336 = vsel %vm110, %v319, 0
  %v339 = vsel %vm110, %v320, 0
  %v342 = vsel %vm110, %v321, 0
  %v345 = vsel %vm110, %v322, 0
  %v348 = vsel %vm110, %v323, 0
  %v351 = vsel %vm110, %v324, 0
  %v354 = vsel %vm110, %v325, 0
  %v357 = vsel %vm110, %v326, 0
  %359 = vmatpush.msra.mxu0 0.0
  %360 = vmatpush.msra.mxu0 0.0
  %361 = vmatpush.msra.mxu0 0.0
  %362 = vmatpush.msra.mxu0 0.0
  %363 = vmatpush.msra.mxu0 0.0
  %364 = vmatpush.msra.mxu0 0.0
  %365 = vmatpush.msra.mxu0 0.0
  %366 = vmatpush.msra.mxu0 0.0
  %367 = vmatpush.msra.mxu0 0.0
  %368 = vmatpush.msra.mxu0 0.0
  %369 = vmatpush.msra.mxu0 0.0
  %370 = vmatpush.msra.mxu0 0.0
  %371 = vmatpush.msra.mxu0 %v330
  %372 = vmatpush.msra.mxu0 %v329
  %373 = vmatpush.msra.mxu0 %v328
  %374 = vmatpush.msra.mxu0 %v327
  %375 = vmatmul.f32.gmra.mxu0 %v336
  %v376 = vpop.f32.mrf.mxu0
  %v377 = vadd.f32 %v333, %v376
  %378 = vmatmul.f32.gmra.mxu0 %v339
  %v379 = vpop.f32.mrf.mxu0
  %v380 = vadd.f32 %v333, %v379
  %381 = vmatmul.f32.gmra.mxu0 %v342
  %v382 = vpop.f32.mrf.mxu0
  %v383 = vadd.f32 %v333, %v382
  %384 = vmatmul.f32.gmra.mxu0 %v345
  %v385 = vpop.f32.mrf.mxu0
  %v386 = vadd.f32 %v333, %v385
  %387 = vmatmul.f32.gmra.mxu0 %v348
  %v388 = vpop.f32.mrf.mxu0
  %v389 = vadd.f32 %v333, %v388
  %390 = vmatmul.f32.gmra.mxu0 %v351
  %v391 = vpop.f32.mrf.mxu0
  %v392 = vadd.f32 %v333, %v391
  %393 = vmatmul.f32.gmra.mxu0 %v354
  %v394 = vpop.f32.mrf.mxu0
  %v395 = vadd.f32 %v333, %v394
  %396 = vmatmul.f32.gmra.mxu0 %v357
  %v397 = vpop.f32.mrf.mxu0
  %v398 = vadd.f32 %v333, %v397
  %399 = vdwg.mxu0
  %v400 = vsel %vm40, %v377, -inf
  %401 = vmax.xlane.f32.xlu0 %v400
  %v402 = vpop.xlane.xlu0 %401
  %v403 = vsel %vm40, %v380, -inf
  %404 = vmax.xlane.f32.xlu0 %v403
  %v405 = vpop.xlane.xlu0 %404
  %v406 = vsel %vm40, %v383, -inf
  %407 = vmax.xlane.f32.xlu0 %v406
  %v408 = vpop.xlane.xlu0 %407
  %v409 = vsel %vm40, %v386, -inf
  %410 = vmax.xlane.f32.xlu0 %v409
  %v411 = vpop.xlane.xlu0 %410
  %v412 = vsel %vm40, %v389, -inf
  %413 = vmax.xlane.f32.xlu0 %v412
  %v414 = vpop.xlane.xlu0 %413
  %v415 = vsel %vm40, %v392, -inf
  %416 = vmax.xlane.f32.xlu0 %v415
  %v417 = vpop.xlane.xlu0 %416
  %v418 = vsel %vm40, %v395, -inf
  %419 = vmax.xlane.f32.xlu0 %v418
  %v420 = vpop.xlane.xlu0 %419
  %v421 = vsel %vm40, %v398, -inf
  %422 = vmax.xlane.f32.xlu0 %v421
  %v423 = vpop.xlane.xlu0 %422
  %v424 = vsub.f32 %v377, %v402
  %v425 = vsub.f32 %v380, %v405
  %v426 = vsub.f32 %v383, %v408
  %v427 = vsub.f32 %v386, %v411
  %v428 = vsub.f32 %v389, %v414
  %v429 = vsub.f32 %v392, %v417
  %v430 = vsub.f32 %v395, %v420
  %v431 = vsub.f32 %v398, %v423
  %v432 = vmul.f32 %v424, 1.442695
  %v433 = vpow.pop %v432
  %v434 = vmul.f32 %v425, 1.442695
  %v435 = vpow.pop %v434
  %v436 = vmul.f32 %v426, 1.442695
  %v437 = vpow.pop %v436
  %v438 = vmul.f32 %v427, 1.442695
  %v439 = vpow.pop %v438
  %v440 = vmul.f32 %v428, 1.442695
  %v441 = vpow.pop %v440
  %v442 = vmul.f32 %v429, 1.442695
  %v443 = vpow.pop %v442
  %v444 = vmul.f32 %v430, 1.442695
  %v445 = vpow.pop %v444
  %v446 = vmul.f32 %v431, 1.442695
  %v447 = vpow.pop %v446
  %v448 = vsel %vm40, %v433, 0.0
  %449 = vadd.xlane.f32.xlu0 %v448
  %v450 = vpop.xlane.xlu0 %449
  %v451 = vsel %vm40, %v435, 0.0
  %452 = vadd.xlane.f32.xlu0 %v451
  %v453 = vpop.xlane.xlu0 %452
  %v454 = vsel %vm40, %v437, 0.0
  %455 = vadd.xlane.f32.xlu0 %v454
  %v456 = vpop.xlane.xlu0 %455
  %v457 = vsel %vm40, %v439, 0.0
  %458 = vadd.xlane.f32.xlu0 %v457
  %v459 = vpop.xlane.xlu0 %458
  %v460 = vsel %vm40, %v441, 0.0
  %461 = vadd.xlane.f32.xlu0 %v460
  %v462 = vpop.xlane.xlu0 %461
  %v463 = vsel %vm40, %v443, 0.0
  %464 = vadd.xlane.f32.xlu0 %v463
  %v465 = vpop.xlane.xlu0 %464
  %v466 = vsel %vm40, %v445, 0.0
  %467 = vadd.xlane.f32.xlu0 %v466
  %v468 = vpop.xlane.xlu0 %467
  %v469 = vsel %vm40, %v447, 0.0
  %470 = vadd.xlane.f32.xlu0 %v469
  %v471 = vpop.xlane.xlu0 %470
  %v472 = vlog2.pop %v450
  %v473 = vmul.f32 %v472, 0.6931472
  %v474 = vlog2.pop %v453
  %v475 = vmul.f32 %v474, 0.6931472
  %v476 = vlog2.pop %v456
  %v477 = vmul.f32 %v476, 0.6931472
  %v478 = vlog2.pop %v459
  %v479 = vmul.f32 %v478, 0.6931472
  %v480 = vlog2.pop %v462
  %v481 = vmul.f32 %v480, 0.6931472
  %v482 = vlog2.pop %v465
  %v483 = vmul.f32 %v482, 0.6931472
  %v484 = vlog2.pop %v468
  %v485 = vmul.f32 %v484, 0.6931472
  %v486 = vlog2.pop %v471
  %v487 = vmul.f32 %v486, 0.6931472
  %v488 = vsub.f32 %v424, %v473
  %v489 = vsub.f32 %v425, %v475
  %v490 = vsub.f32 %v426, %v477
  %v491 = vsub.f32 %v427, %v479
  %v492 = vsub.f32 %v428, %v481
  %v493 = vsub.f32 %v429, %v483
  %v494 = vsub.f32 %v430, %v485
  %v495 = vsub.f32 %v431, %v487
  %v496 = vrcp.pop %v450
  %v497 = vmul.f32 %v450, %v496
  %v498 = vsub.f32 1.0, %v497
  %v499 = vmul.f32 %v496, %v498
  %v500 = vadd.f32 %v496, %v499
  %vm501 = vweird.f32 %v450
  %vm502 = vweird.f32 %v496
  %vm503 = vmor %vm501, %vm502
  %v504 = vsel %vm503, %v496, %v500
  %v505 = vand.u32 2147483647, %v450
  %vm506 = vcmp.eq.f32.partialorder %v505, 8.507059e+37
  %v507 = vand.u32 %v450, 2147483648
  %v508 = vor.u32 1.1754944e-38, %v507
  %v509 = vsel %vm506, %v508, %v504
  %v510 = vrcp.pop %v453
  %v511 = vmul.f32 %v453, %v510
  %v512 = vsub.f32 1.0, %v511
  %v513 = vmul.f32 %v510, %v512
  %v514 = vadd.f32 %v510, %v513
  %vm515 = vweird.f32 %v453
  %vm516 = vweird.f32 %v510
  %vm517 = vmor %vm515, %vm516
  %v518 = vsel %vm517, %v510, %v514
  %v519 = vand.u32 2147483647, %v453
  %vm520 = vcmp.eq.f32.partialorder %v519, 8.507059e+37
  %v521 = vand.u32 %v453, 2147483648
  %v522 = vor.u32 1.1754944e-38, %v521
  %v523 = vsel %vm520, %v522, %v518
  %v524 = vrcp.pop %v456
  %v525 = vmul.f32 %v456, %v524
  %v526 = vsub.f32 1.0, %v525
  %v527 = vmul.f32 %v524, %v526
  %v528 = vadd.f32 %v524, %v527
  %vm529 = vweird.f32 %v456
  %vm530 = vweird.f32 %v524
  %vm531 = vmor %vm529, %vm530
  %v532 = vsel %vm531, %v524, %v528
  %v533 = vand.u32 2147483647, %v456
  %vm534 = vcmp.eq.f32.partialorder %v533, 8.507059e+37
  %v535 = vand.u32 %v456, 2147483648
  %v536 = vor.u32 1.1754944e-38, %v535
  %v537 = vsel %vm534, %v536, %v532
  %v538 = vrcp.pop %v459
  %v539 = vmul.f32 %v459, %v538
  %v540 = vsub.f32 1.0, %v539
  %v541 = vmul.f32 %v538, %v540
  %v542 = vadd.f32 %v538, %v541
  %vm543 = vweird.f32 %v459
  %vm544 = vweird.f32 %v538
  %vm545 = vmor %vm543, %vm544
  %v546 = vsel %vm545, %v538, %v542
  %v547 = vand.u32 2147483647, %v459
  %vm548 = vcmp.eq.f32.partialorder %v547, 8.507059e+37
  %v549 = vand.u32 %v459, 2147483648
  %v550 = vor.u32 1.1754944e-38, %v549
  %v551 = vsel %vm548, %v550, %v546
  %v552 = vrcp.pop %v462
  %v553 = vmul.f32 %v462, %v552
  %v554 = vsub.f32 1.0, %v553
  %v555 = vmul.f32 %v552, %v554
  %v556 = vadd.f32 %v552, %v555
  %vm557 = vweird.f32 %v462
  %vm558 = vweird.f32 %v552
  %vm559 = vmor %vm557, %vm558
  %v560 = vsel %vm559, %v552, %v556
  %v561 = vand.u32 2147483647, %v462
  %vm562 = vcmp.eq.f32.partialorder %v561, 8.507059e+37
  %v563 = vand.u32 %v462, 2147483648
  %v564 = vor.u32 1.1754944e-38, %v563
  %v565 = vsel %vm562, %v564, %v560
  %v566 = vrcp.pop %v465
  %v567 = vmul.f32 %v465, %v566
  %v568 = vsub.f32 1.0, %v567
  %v569 = vmul.f32 %v566, %v568
  %v570 = vadd.f32 %v566, %v569
  %vm571 = vweird.f32 %v465
  %vm572 = vweird.f32 %v566
  %vm573 = vmor %vm571, %vm572
  %v574 = vsel %vm573, %v566, %v570
  %v575 = vand.u32 2147483647, %v465
  %vm576 = vcmp.eq.f32.partialorder %v575, 8.507059e+37
  %v577 = vand.u32 %v465, 2147483648
  %v578 = vor.u32 1.1754944e-38, %v577
  %v579 = vsel %vm576, %v578, %v574
  %v580 = vrcp.pop %v468
  %v581 = vmul.f32 %v468, %v580
  %v582 = vsub.f32 1.0, %v581
  %v583 = vmul.f32 %v580, %v582
  %v584 = vadd.f32 %v580, %v583
  %vm585 = vweird.f32 %v468
  %vm586 = vweird.f32 %v580
  %vm587 = vmor %vm585, %vm586
  %v588 = vsel %vm587, %v580, %v584
  %v589 = vand.u32 2147483647, %v468
  %vm590 = vcmp.eq.f32.partialorder %v589, 8.507059e+37
  %v591 = vand.u32 %v468, 2147483648
  %v592 = vor.u32 1.1754944e-38, %v591
  %v593 = vsel %vm590, %v592, %v588
  %v594 = vrcp.pop %v471
  %v595 = vmul.f32 %v471, %v594
  %v596 = vsub.f32 1.0, %v595
  %v597 = vmul.f32 %v594, %v596
  %v598 = vadd.f32 %v594, %v597
  %vm599 = vweird.f32 %v471
  %vm600 = vweird.f32 %v594
  %vm601 = vmor %vm599, %vm600
  %v602 = vsel %vm601, %v594, %v598
  %v603 = vand.u32 2147483647, %v471
  %vm604 = vcmp.eq.f32.partialorder %v603, 8.507059e+37
  %v605 = vand.u32 %v471, 2147483648
  %v606 = vor.u32 1.1754944e-38, %v605
  %v607 = vsel %vm604, %v606, %v602
  %v608 = vmul.f32 %v433, %v509
  %v609 = vmul.f32 %v435, %v523
  %v610 = vmul.f32 %v437, %v537
  %v611 = vmul.f32 %v439, %v551
  %v612 = vmul.f32 %v441, %v565
  %v613 = vmul.f32 %v443, %v579
  %v614 = vmul.f32 %v445, %v593
  %v615 = vmul.f32 %v447, %v607
  %616 = vst.msk [vmem:[%s6] sm:$0xff] %vm40, %v488
  %617 = vst.msk [vmem:[%s6 + $0x8] sm:$0xff] %vm40, %v489
  %618 = vst.msk [vmem:[%s6 + $0x10] sm:$0xff] %vm40, %v490
  %619 = vst.msk [vmem:[%s6 + $0x18] sm:$0xff] %vm40, %v491
  %620 = vst.msk [vmem:[%s6 + $0x20] sm:$0xff] %vm40, %v492
  %621 = vst.msk [vmem:[%s6 + $0x28] sm:$0xff] %vm40, %v493
  %622 = vst.msk [vmem:[%s6 + $0x30] sm:$0xff] %vm40, %v494
  %623 = vst.msk [vmem:[%s6 + $0x38] sm:$0xff] %vm40, %v495
  %v624 = vmul.f32 %v608, %v488
  %v625 = vmul.f32 %v609, %v489
  %v626 = vmul.f32 %v610, %v490
  %v627 = vmul.f32 %v611, %v491
  %v628 = vmul.f32 %v612, %v492
  %v629 = vmul.f32 %v613, %v493
  %v630 = vmul.f32 %v614, %v494
  %v631 = vmul.f32 %v615, %v495
  %v632 = vsel %vm40, %v624, 0.0
  %633 = vadd.xlane.f32.xlu0 %v632
  %v634 = vpop.xlane.xlu0 %633
  %v635 = vsel %vm40, %v625, 0.0
  %636 = vadd.xlane.f32.xlu0 %v635
  %v637 = vpop.xlane.xlu0 %636
  %v638 = vsel %vm40, %v626, 0.0
  %639 = vadd.xlane.f32.xlu0 %v638
  %v640 = vpop.xlane.xlu0 %639
  %v641 = vsel %vm40, %v627, 0.0
  %642 = vadd.xlane.f32.xlu0 %v641
  %v643 = vpop.xlane.xlu0 %642
  %v644 = vsel %vm40, %v628, 0.0
  %645 = vadd.xlane.f32.xlu0 %v644
  %v646 = vpop.xlane.xlu0 %645
  %v647 = vsel %vm40, %v629, 0.0
  %648 = vadd.xlane.f32.xlu0 %v647
  %v649 = vpop.xlane.xlu0 %648
  %v650 = vsel %vm40, %v630, 0.0
  %651 = vadd.xlane.f32.xlu0 %v650
  %v652 = vpop.xlane.xlu0 %651
  %v653 = vsel %vm40, %v631, 0.0
  %654 = vadd.xlane.f32.xlu0 %v653
  %v655 = vpop.xlane.xlu0 %654
  %v656 = vsub.f32 0.0, %v634
  %v657 = vsub.f32 0.0, %v637
  %v658 = vsub.f32 0.0, %v640
  %v659 = vsub.f32 0.0, %v643
  %v660 = vsub.f32 0.0, %v646
  %v661 = vsub.f32 0.0, %v649
  %v662 = vsub.f32 0.0, %v652
  %v663 = vsub.f32 0.0, %v655
  %vm664 = vcmask 7168
  %665 = vst.msk [vmem:[%s8] sm:$0xff] %vm664, %v656
  %666 = vst.msk [vmem:[%s8 + $0x8] sm:$0xff] %vm664, %v657
  %667 = vst.msk [vmem:[%s8 + $0x10] sm:$0xff] %vm664, %v658
  %668 = vst.msk [vmem:[%s8 + $0x18] sm:$0xff] %vm664, %v659
  %669 = vst.msk [vmem:[%s8 + $0x20] sm:$0xff] %vm664, %v660
  %670 = vst.msk [vmem:[%s8 + $0x28] sm:$0xff] %vm664, %v661
  %671 = vst.msk [vmem:[%s8 + $0x30] sm:$0xff] %vm664, %v662
  %672 = vst.msk [vmem:[%s8 + $0x38] sm:$0xff] %vm664, %v663
  %v673 = vsub.f32 0.0, %v473
  %v674 = vsub.f32 0.0, %v475
  %v675 = vsub.f32 0.0, %v477
  %v676 = vsub.f32 0.0, %v479
  %v677 = vsub.f32 0.0, %v481
  %v678 = vsub.f32 0.0, %v483
  %v679 = vsub.f32 0.0, %v485
  %v680 = vsub.f32 0.0, %v487
  %681 = vst.msk [vmem:[%s7] sm:$0xff] %vm664, %v673
  %682 = vst.msk [vmem:[%s7 + $0x8] sm:$0xff] %vm664, %v674
  %683 = vst.msk [vmem:[%s7 + $0x10] sm:$0xff] %vm664, %v675
  %684 = vst.msk [vmem:[%s7 + $0x18] sm:$0xff] %vm664, %v676
  %685 = vst.msk [vmem:[%s7 + $0x20] sm:$0xff] %vm664, %v677
  %686 = vst.msk [vmem:[%s7 + $0x28] sm:$0xff] %vm664, %v678
  %687 = vst.msk [vmem:[%s7 + $0x30] sm:$0xff] %vm664, %v679
  %688 = vst.msk [vmem:[%s7 + $0x38] sm:$0xff] %vm664, %v680
  // Predicated region
  $region26: #{tpu_custom_call.1} parent=0 // pred_check
    _
  $region27: #{tpu_custom_call.1} parent=0 // pred_check_branch
    %690 = sbr.rel (0) target = $region29
  $region28: #{tpu_custom_call.1} parent=0 // pred_region
    _
  $region29: #{tpu_custom_call.1} parent=0 // pred_fallthru
    _
  // Predicated region
  $region30: #{tpu_custom_call.1} parent=0 // pred_check
    _
  $region31: #{tpu_custom_call.1} parent=0 // pred_check_branch
    %692 = sbr.rel (0) target = $region33
  $region32: #{tpu_custom_call.1} parent=0 // pred_region
    _
  $region33: #{tpu_custom_call.1} parent=0 // pred_fallthru
    _
  // Predicated region
  $region34: #{tpu_custom_call.1} parent=0 // pred_check
    _
  $region35: #{tpu_custom_call.1} parent=0 // pred_check_branch
    %694 = sbr.rel (0) target = $region37
  $region36: #{tpu_custom_call.1} parent=0 // pred_region
    _
  $region37: #{tpu_custom_call.1} parent=0 // pred_fallthru
    _
  // Predicated region
  $region38: #{tpu_custom_call.1} parent=0 // pred_check
    _
  $region39: #{tpu_custom_call.1} parent=0 // pred_check_branch
    %696 = sbr.rel (0) target = $region41
  $region40: #{tpu_custom_call.1} parent=0 // pred_region
    _
  $region41: #{tpu_custom_call.1} parent=0 // pred_fallthru
    _
  // Predicated region
  $region42: #{tpu_custom_call.1} parent=0 // pred_check
    _
  $region43: #{tpu_custom_call.1} parent=0 // pred_check_branch
    %698 = sbr.rel (0) target = $region45
  $region44: #{tpu_custom_call.1} parent=0 // pred_region
    _
  $region45: #{tpu_custom_call.1} parent=0 // pred_fallthru
    _
  // Predicated region
  $region46: #{tpu_custom_call.1} parent=0 // pred_check
    _
  $region47: #{tpu_custom_call.1} parent=0 // pred_check_branch
    %700 = sbr.rel (0) target = $region49
  $region48: #{tpu_custom_call.1} parent=0 // pred_region
    _
  $region49: #{tpu_custom_call.1} parent=0 // pred_fallthru
    _

</llo_original>
